<compile_context>
chip_gen: v7x
topology: tpu7x:2x2x1
jax: 0.10.0
libtpu: 0.0.40
codegen_flags: <defaults>
</compile_context>

<pallas_src>
import functools

import jax
import jax.numpy as jnp
from jax.experimental import pallas as pl
from jax.experimental.pallas import tpu as pltpu

_LANE = 128
# LCM of sublane packing granules: f32 -> 8, bf16 -> 16, int8/fp8 -> 32 rows.
_ROW_ALIGN = 32
# At or below this size a single full-array block is used (pipelining is moot).
_SMALL_ARRAY_BYTES = 2 * 1024 * 1024
# Minimum pipeline depth for larger arrays: >= 4 and even (v7x 2-TC balance).
_MIN_PIPELINE_STEPS = 4


def _vmem_plan():
    """Return (target_block_bytes, vmem_limit_bytes) for the current device."""
    try:
        cap = int(pltpu.get_tpu_info().vmem_capacity_bytes)
    except Exception:
        cap = 64 * 1024 * 1024  # conservative (v7x-sized) fallback
    if cap >= 100 * 1024 * 1024:
        # v5e / v6e: 128 MiB physical VMEM -> large blocks, ample headroom.
        return 16 * 1024 * 1024, 80 * 1024 * 1024
    # v7x: 64 MiB physical per TensorCore -> keep 4x block (~32 MiB) resident
    # and leave room for Mosaic internal scratch.
    return 8 * 1024 * 1024, 40 * 1024 * 1024


def _round_up(v, m):
    return (v + m - 1) // m * m


def _select_tm(rows, lane, itemsize, target_block_bytes):
    """Row-tile size: large aligned blocks, never collapsing to grid=(1,)."""
    total_bytes = rows * lane * itemsize
    if total_bytes <= _SMALL_ARRAY_BYTES or rows <= _ROW_ALIGN:
        # Tiny input: single block equal to the full array dims (always legal).
        return rows
    max_tm = max(_ROW_ALIGN,
                 (target_block_bytes // (lane * itemsize)) // _ROW_ALIGN * _ROW_ALIGN)
    steps = max(_MIN_PIPELINE_STEPS, pl.cdiv(rows, max_tm))
    if steps % 2:
        steps += 1  # even step count: balanced split across v7x's two TCs
    tm = _round_up(pl.cdiv(rows, steps), _ROW_ALIGN)
    return max(_ROW_ALIGN, min(tm, max_tm))


def _gaussian_kernel_body(x_ref, o_ref, *, mu, neg_inv_two_sigma_sq):
    # mu / neg_inv_two_sigma_sq are Python floats -> lowered as immediates.
    x = x_ref[...].astype(jnp.float32)
    d = x - mu
    o_ref[...] = jnp.exp((d * d) * neg_inv_two_sigma_sq).astype(o_ref.dtype)


def _run_2d(x2d: jax.Array, mu: float, neg_inv_two_sigma_sq: float) -> jax.Array:
    rows, lane = x2d.shape
    itemsize = jnp.dtype(x2d.dtype).itemsize
    target_block_bytes, vmem_limit = _vmem_plan()
    tm = _select_tm(rows, lane, itemsize, target_block_bytes)
    grid = (pl.cdiv(rows, tm),)
    n = rows * lane

    kernel = functools.partial(
        _gaussian_kernel_body,
        mu=mu,
        neg_inv_two_sigma_sq=neg_inv_two_sigma_sq,
    )

    return pl.pallas_call(
        kernel,
        out_shape=jax.ShapeDtypeStruct((rows, lane), x2d.dtype),
        grid_spec=pltpu.PrefetchScalarGridSpec(
            num_scalar_prefetch=0,
            grid=grid,
            in_specs=[pl.BlockSpec((tm, lane), lambda i: (i, 0))],
            out_specs=pl.BlockSpec((tm, lane), lambda i: (i, 0)),
        ),
        compiler_params=pltpu.CompilerParams(
            dimension_semantics=("parallel",),
            vmem_limit_bytes=vmem_limit,
        ),
        cost_estimate=pl.CostEstimate(
            flops=3 * n, transcendentals=n, bytes_accessed=2 * n * itemsize),
    )(x2d)


def gaussian_kernel(x: jax.Array, mu: float = 1.0, sigma: float = 1.0) -> jax.Array:
    """Elementwise exp(-0.5 * (x - mu)^2 / sigma^2) via a Pallas TPU kernel."""
    orig_shape = x.shape
    orig_dtype = x.dtype
    # TODO(synk): if mu/sigma ever need to be traced (jit-varying) values, pass
    # them as SMEM scalar operands instead of baking Python-float immediates.
    mu_f = float(mu)
    neg_inv_two_sigma_sq = -0.5 / (float(sigma) ** 2)

    flat = x.reshape(-1)
    n = flat.shape[0]
    if n == 0:
        return x

    if n % _LANE == 0:
        # Common case (e.g. NCHW with numel % 128 == 0): free reshape, no
        # padding, no extra HBM passes.
        x2d = flat.reshape(n // _LANE, _LANE)
        return _run_2d(x2d, mu_f, neg_inv_two_sigma_sq).reshape(orig_shape)

    # Ragged case: Pallas kernel on the aligned prefix, plain jnp on the
    # (<128-element) tail; avoids whole-tensor pad + slice HBM passes.
    n_main = n - (n % _LANE)
    if n_main == 0:
        d = flat.astype(jnp.float32) - mu_f
        return jnp.exp(d * d * neg_inv_two_sigma_sq).astype(orig_dtype).reshape(orig_shape)

    head = _run_2d(flat[:n_main].reshape(n_main // _LANE, _LANE),
                   mu_f, neg_inv_two_sigma_sq).reshape(-1)
    dt = flat[n_main:].astype(jnp.float32) - mu_f
    tail = jnp.exp(dt * dt * neg_inv_two_sigma_sq).astype(orig_dtype)
    return jnp.concatenate([head, tail]).reshape(orig_shape)


def gaussian_kernel_ref(x, mu=1.0, sigma=1.0):
    return jnp.exp(-0.5 * (x - mu) ** 2 / sigma ** 2)


if __name__ == "__main__":
    key = jax.random.PRNGKey(0)
    mu, sigma = 1.0, 1.0

    # NCHW-style input consistent with the module's typical use (aligned path).
    x = jax.random.normal(key, (2, 4, 16, 16), dtype=jnp.float32)
    y = gaussian_kernel(x, mu=mu, sigma=sigma)
    jax.block_until_ready(y)
    y_ref = gaussian_kernel_ref(x, mu=mu, sigma=sigma)
    assert y.shape == x.shape and y.dtype == x.dtype
    assert jnp.allclose(y, y_ref, atol=1e-6, rtol=1e-6)

    # Exercise the ragged (numel % 128 != 0) path as well.
    x_r = jax.random.normal(jax.random.PRNGKey(1), (3, 5, 7), dtype=jnp.float32)
    y_r = gaussian_kernel(x_r, mu=mu, sigma=sigma)
    jax.block_until_ready(y_r)
    assert y_r.shape == x_r.shape and y_r.dtype == x_r.dtype
    assert jnp.allclose(y_r, gaussian_kernel_ref(x_r, mu=mu, sigma=sigma),
                        atol=1e-6, rtol=1e-6)

    print("KERNEL_OK")
</pallas_src>

<mosaic_0001>
module attributes {stable_mosaic.version = 11 : i64} {
  func.func @_gaussian_kernel_body(%arg0: i32, %arg1: memref<16x128xf32, #tpu.memory_space<vmem>>, %arg2: memref<16x128xf32, #tpu.memory_space<vmem>>) attributes {dimension_semantics = [#tpu.dimension_semantics<parallel>], iteration_bounds = array<i64: 1>, scalar_prefetch = 0 : i64, scratch_operands = 0 : i64, tpu.core_type = #tpu.core_type<tc>, window_params = [{transform_indices = @transform_0, window_bounds = array<i64: 16, 128>}, {transform_indices = @transform_1, window_bounds = array<i64: 16, 128>}]} {
    %c0 = arith.constant 0 : index
    %c0_0 = arith.constant 0 : index
    %0 = vector.load %arg1[%c0, %c0_0] : memref<16x128xf32, #tpu.memory_space<vmem>>, vector<16x128xf32>
    %cst = arith.constant 1.000000e+00 : f32
    %1 = vector.broadcast %cst : f32 to vector<16x128xf32>
    %2 = arith.subf %0, %1 : vector<16x128xf32>
    %3 = arith.mulf %2, %2 : vector<16x128xf32>
    %cst_1 = arith.constant -5.000000e-01 : f32
    %4 = vector.broadcast %cst_1 : f32 to vector<16x128xf32>
    %5 = arith.mulf %3, %4 : vector<16x128xf32>
    %6 = math.exp %5 : vector<16x128xf32>
    %c0_2 = arith.constant 0 : index
    %c0_3 = arith.constant 0 : index
    %7 = vector.load %arg2[%c0_2, %c0_3] : memref<16x128xf32, #tpu.memory_space<vmem>>, vector<16x128xf32>
    tpu.vector_store %arg2[%c0_2, %c0_3], %6 {strides = array<i32>} : memref<16x128xf32, #tpu.memory_space<vmem>>, vector<16x128xf32>,
    return
  }
  func.func @transform_0(%arg0: i32) -> (i32, i32) {
    %c0_i32 = arith.constant 0 : i32
    %c0_i32_0 = arith.constant 0 : i32
    return %arg0, %c0_i32 : i32, i32
  }
  func.func @transform_1(%arg0: i32) -> (i32, i32) {
    %c0_i32 = arith.constant 0 : i32
    %c0_i32_0 = arith.constant 0 : i32
    return %arg0, %c0_i32 : i32, i32
  }
}

</mosaic_0001>

<llo_original>
// kernel: tpu_custom_call.1
$region0: #{tpu_custom_call.1}
  #allocation0 [shape = 'u32[]', space=smem, size = 0x4, offset = 0x4, fixed_abs, tag = 'smem constant byte address 0x4 - core index']
  #allocation1 [shape = 'u32[144,128]{1,0:T(1,128)}', space=vmem, size = 0x12000, scoped, tag = 'internal scratch']
  %s0 = inlined_call_operand.hbm [shape: f32[16,128], index: 0, kind: input, shape index: {}]
  %s1 = inlined_call_operand.hbm [shape: f32[16,128], index: 1, kind: output, shape index: {}]
  %s2 = sld [smem:[#allocation0]]
  $region18: #{tpu_custom_call.1} parent=0
    _
  %s4 = ssub.s32 1, %s2
  %s5 = scalar_select 0, %s4, %s2
  $region1: #{tpu_custom_call.1} parent=0
    #allocation2 [shape = 'u8[8192]{0}', space=vmem, size = 0x2000, scoped, tag = 'input window, operand 0, single buffered']
    #allocation3 [shape = 's32[1]{0}', space=sflag, size = 0x4, scoped, tag = 'scoped memory for tpu_custom_call.1']
    #allocation4 [shape = 's32[1]{0}', space=sflag, size = 0x4, scoped, tag = 'scoped memory for tpu_custom_call.1']
    #allocation5 [shape = 'u8[8192]{0}', space=vmem, size = 0x2000, scoped, tag = 'output window, operand 0, single buffered']
    %6 = vsyncpa [#allocation3], 0
    %7 = vsyncpa [#allocation4], 0
    // Predicated region
    $region2: #{tpu_custom_call.1} parent=1 // pred_check
      _
    $region3: #{tpu_custom_call.1} parent=1 // pred_check_branch
      %9 = sbr.rel (0) target = $region5
    $region4: #{tpu_custom_call.1} parent=1 // pred_region
      %s11 = ssub.s32 256, 256
      %12 = vsyncadd [#allocation3], %s11
      %s13 = sshll.u32 [#allocation2], 4
      %s14 = int_to_ptr.vmem [resolvable:$true] %s13
      %19 = dma.hbm_to_vmem [thread:$0]  %s0, 256, %s14, [#allocation3], 128, 128, 8
    $region5: #{tpu_custom_call.1} parent=1 // pred_fallthru
      _
    // Predicated region
    $region6: #{tpu_custom_call.1} parent=1 // pred_check
      _
    $region7: #{tpu_custom_call.1} parent=1 // pred_check_branch
      %21 = sbr.rel (0) target = $region9
    $region8: #{tpu_custom_call.1} parent=1 // pred_region
      %22 = dma.done [#allocation3], 256
    $region9: #{tpu_custom_call.1} parent=1 // pred_fallthru
      _
    %v23 = vld [vmem:[#allocation2] sm:$0xff]
    %v24 = vld [vmem:[#allocation2 + $0x8] sm:$0xff]
    %v25 = vsub.f32 %v23, 1.0
    %v26 = vsub.f32 %v24, 1.0
    %v27 = vmul.f32 %v25, %v25
    %v28 = vmul.f32 %v26, %v26
    %v29 = vmul.f32 %v27, -0.5
    %v30 = vmul.f32 %v28, -0.5
    %v31 = vmul.f32 %v29, 1.442695
    %v32 = vpow.pop %v31
    %v33 = vmul.f32 %v30, 1.442695
    %v34 = vpow.pop %v33
    %35 = vst [vmem:[#allocation5] sm:$0xff] %v32
    %36 = vst [vmem:[#allocation5 + $0x8] sm:$0xff] %v34
    // Predicated region
    $region10: #{tpu_custom_call.1} parent=1 // pred_check
      _
    $region11: #{tpu_custom_call.1} parent=1 // pred_check_branch
      %38 = sbr.rel (0) target = $region13
    $region12: #{tpu_custom_call.1} parent=1 // pred_region
      %s40 = ssub.s32 256, 256
      %41 = vsyncadd [#allocation4], %s40
      %s42 = sshll.u32 [#allocation5], 4
      %s43 = int_to_ptr.vmem [resolvable:$true] %s42
      %48 = dma.vmem_to_hbm [thread:$0]  %s43, 256, %s1, [#allocation4], 128, 128, 8
    $region13: #{tpu_custom_call.1} parent=1 // pred_fallthru
      _
    // Predicated region
    $region14: #{tpu_custom_call.1} parent=1 // pred_check
      _
    $region15: #{tpu_custom_call.1} parent=1 // pred_check_branch
      %50 = sbr.rel (0) target = $region17
    $region16: #{tpu_custom_call.1} parent=1 // pred_region
      %51 = dma.done [#allocation4], 256
    $region17: #{tpu_custom_call.1} parent=1 // pred_fallthru
      _
    %52 = vsyncpa [#allocation3], 1
    %53 = vsyncpa [#allocation4], 1

</llo_original>
